<compile_context>
chip_gen: v7x
topology: tpu7x:2x2x1
jax: 0.10.0
libtpu: 0.0.40
codegen_flags: <defaults>
</compile_context>

<pallas_src>
import math

import jax
import jax.numpy as jnp
from jax.experimental import pallas as pl
from jax.experimental.pallas import tpu as pltpu


def _pe_add_kernel(x_ref, pe_ref, o_ref):
    # x_ref/o_ref: (ts, lane_tile); pe_ref: (1, lane_tile) broadcast over the seq rows.
    o_ref[...] = x_ref[...] + pe_ref[...]


def make_pe_table(max_len, d_model, dtype=jnp.float32):
    """Deterministic positional-encoding buffer, identical to the PyTorch __init__."""
    position = jnp.arange(max_len, dtype=jnp.float32)[:, None]            # (max_len, 1)
    div_term = jnp.exp(
        jnp.arange(0, d_model, 2, dtype=jnp.float32) * (-math.log(10000.0) / d_model)
    )                                                                      # (d_model//2,)
    pe = jnp.zeros((max_len, d_model), dtype=jnp.float32)
    pe = pe.at[:, 0::2].set(jnp.sin(position * div_term))
    pe = pe.at[:, 1::2].set(jnp.cos(position * div_term))
    return pe[None, :, :].astype(dtype)                                    # (1, max_len, d_model)


def prepare_pe_slice(pe, batch, dtype):
    """Precompute (once per shape/dtype) the lane-dense pe row added in forward.

    Reproduces the module's `pe[:, :x.size(1), :]` indexing (by the BATCH dim,
    exactly as written in the PyTorch source), casts to the activation dtype and
    collapses (B, D) into a lane-dense last dim.  Shape (1, B*D), no padding.
    """
    pe_slice = pe[0, :batch, :].astype(dtype)            # (B, D)
    b, d = pe_slice.shape
    return pe_slice.reshape(1, b * d)                    # (1, B*D)


def _choose_tiles(S, BD, itemsize, target_tile_bytes):
    # Dtype-aware sublane packing: 8 rows (f32), 16 (bf16), 32 (int8/fp8).
    sub = max(8, 32 // itemsize)

    # Lane tile: take the full (B*D) row when it fits the per-buffer budget
    # (a full-extent last dim is exempt from the 128-divisibility rule); otherwise
    # split the lane axis in 128-multiples so one buffer can't blow past scoped VMEM.
    if BD <= 128 or sub * BD * itemsize <= target_tile_bytes:
        lane_tile = BD
    else:
        lane_tile = max(128, (target_tile_bytes // (sub * itemsize)) // 128 * 128)

    # Seq tile: fill the rest of the budget, rounded to the sublane pack size.
    ts = target_tile_bytes // (lane_tile * itemsize)
    ts = max(sub, (ts // sub) * sub)
    if ts >= S:
        ts = S                          # single full block along seq (exempt from 8-rule)

    # Megacore (v7x, 2 TCs): make sure a non-trivial problem yields >= 2 grid steps;
    # measured ~neutral on single-TC v5e/v6e, so only split when the work is worth it.
    n_seq, n_lane = pl.cdiv(S, ts), pl.cdiv(BD, lane_tile)
    if n_seq * n_lane == 1 and S >= 2 * sub and S * BD * itemsize >= (1 << 20):
        ts = (((S + 1) // 2) + sub - 1) // sub * sub
    return ts, lane_tile


def positional_encoding_forward(x, pe_row, *, tile_bytes=6 << 20, in_place=False):
    """Eval-mode PositionalEncoding forward: x + pe[:, :x.shape[1], :].

    x:       [S, B, D]
    pe_row:  (1, B*D) from prepare_pe_slice (computed once, reused across calls).
    in_place: pass input_output_aliases={0: 0}; only worthwhile if the caller
              donates x (otherwise XLA inserts a defensive copy).
    """
    S, B, D = x.shape
    BD = B * D
    assert pe_row.shape == (1, BD), "pe_row must come from prepare_pe_slice(pe, B, dtype)"
    itemsize = jnp.dtype(x.dtype).itemsize

    # Lane-dense 2-D view (free, row-major metadata change). No padding, no slicing:
    # ragged tail blocks are handled by Pallas' masked DMA.
    x2 = x.reshape(S, BD)

    ts, lane_tile = _choose_tiles(S, BD, itemsize, tile_bytes)
    grid = (pl.cdiv(S, ts), pl.cdiv(BD, lane_tile))

    out2 = pl.pallas_call(
        _pe_add_kernel,
        out_shape=jax.ShapeDtypeStruct((S, BD), x.dtype),
        grid=grid,
        in_specs=[
            pl.BlockSpec((ts, lane_tile), lambda i, j: (i, j)),
            pl.BlockSpec((1, lane_tile), lambda i, j: (0, j)),  # pe: constant along seq axis
        ],
        out_specs=pl.BlockSpec((ts, lane_tile), lambda i, j: (i, j)),
        input_output_aliases=({0: 0} if in_place else {}),
        compiler_params=pltpu.CompilerParams(
            dimension_semantics=("parallel", "parallel"),   # megacore-shardable on v7x
            vmem_limit_bytes=48 << 20,                      # < 64 MiB (v7x physical ceiling)
        ),
        cost_estimate=pl.CostEstimate(
            flops=S * BD,
            transcendentals=0,
            bytes_accessed=(2 * S * BD + BD) * itemsize,
        ),
    )(x2, pe_row)

    return out2.reshape(S, B, D)


if __name__ == "__main__":
    MAX_LEN = 64

    # 1) Small shape consistent with the module: [seq_len, batch, d_model].
    S, B, D = 8, 4, 32
    key = jax.random.PRNGKey(0)
    x = jax.random.normal(key, (S, B, D), dtype=jnp.float32)
    pe = make_pe_table(MAX_LEN, D)
    pe_row = prepare_pe_slice(pe, B, x.dtype)           # computed ONCE, reused across calls
    out = jax.block_until_ready(positional_encoding_forward(x, pe_row))
    ref = x + pe[:, :B, :]                              # eval-mode dropout == identity
    assert out.shape == (S, B, D)
    assert jnp.allclose(out, ref, atol=1e-6), "mismatch vs reference (small shape)"

    # 2) Multi-tile seq path with a non-divisible tail (force small tiles).
    S2 = 200
    x2 = jax.random.normal(jax.random.PRNGKey(1), (S2, B, D), dtype=jnp.float32)
    out2 = jax.block_until_ready(
        positional_encoding_forward(x2, pe_row, tile_bytes=16 * 1024))
    ref2 = x2 + pe[:, :B, :]
    assert out2.shape == (S2, B, D)
    assert jnp.allclose(out2, ref2, atol=1e-6), "mismatch vs reference (tiled seq)"

    # 3) Non-(8,128)-aligned shapes: S not a multiple of 8, B*D not a multiple of 128.
    S3, B3, D3 = 13, 3, 20
    x3 = jax.random.normal(jax.random.PRNGKey(2), (S3, B3, D3), dtype=jnp.float32)
    pe3 = make_pe_table(MAX_LEN, D3)
    pe_row3 = prepare_pe_slice(pe3, B3, x3.dtype)
    out3 = jax.block_until_ready(positional_encoding_forward(x3, pe_row3))
    ref3 = x3 + pe3[:, :B3, :]
    assert out3.shape == (S3, B3, D3)
    assert jnp.allclose(out3, ref3, atol=1e-6), "mismatch vs reference (unaligned shape)"

    # 4) Lane-split path (B*D tiled along the lane axis, 2-D grid).
    S4, B4, D4 = 16, 4, 512
    x4 = jax.random.normal(jax.random.PRNGKey(3), (S4, B4, D4), dtype=jnp.float32)
    pe4 = make_pe_table(MAX_LEN, D4)
    pe_row4 = prepare_pe_slice(pe4, B4, x4.dtype)
    out4 = jax.block_until_ready(
        positional_encoding_forward(x4, pe_row4, tile_bytes=4 * 1024))
    ref4 = x4 + pe4[:, :B4, :]
    assert out4.shape == (S4, B4, D4)
    assert jnp.allclose(out4, ref4, atol=1e-6), "mismatch vs reference (lane-split)"

    print("KERNEL_OK")
</pallas_src>

<mosaic_0001>
module attributes {stable_mosaic.version = 11 : i64} {
  func.func @_pe_add_kernel(%arg0: i32, %arg1: i32, %arg2: memref<8x128xf32, #tpu.memory_space<vmem>>, %arg3: memref<1x128xf32, #tpu.memory_space<vmem>>, %arg4: memref<8x128xf32, #tpu.memory_space<vmem>>) attributes {dimension_semantics = [#tpu.dimension_semantics<parallel>, #tpu.dimension_semantics<parallel>], iteration_bounds = array<i64: 1, 1>, scalar_prefetch = 0 : i64, scratch_operands = 0 : i64, tpu.core_type = #tpu.core_type<tc>, window_params = [{transform_indices = @transform_0, window_bounds = array<i64: 8, 128>}, {transform_indices = @transform_1, window_bounds = array<i64: 1, 128>}, {transform_indices = @transform_2, window_bounds = array<i64: 8, 128>}]} {
    %c0 = arith.constant 0 : index
    %c0_0 = arith.constant 0 : index
    %0 = vector.load %arg2[%c0, %c0_0] : memref<8x128xf32, #tpu.memory_space<vmem>>, vector<8x128xf32>
    %c0_1 = arith.constant 0 : index
    %c0_2 = arith.constant 0 : index
    %1 = vector.load %arg3[%c0_1, %c0_2] : memref<1x128xf32, #tpu.memory_space<vmem>>, vector<1x128xf32>
    %2 = vector.broadcast %1 : vector<1x128xf32> to vector<8x128xf32>
    %3 = arith.addf %0, %2 : vector<8x128xf32>
    %c0_3 = arith.constant 0 : index
    %c0_4 = arith.constant 0 : index
    %4 = vector.load %arg4[%c0_3, %c0_4] : memref<8x128xf32, #tpu.memory_space<vmem>>, vector<8x128xf32>
    tpu.vector_store %arg4[%c0_3, %c0_4], %3 {strides = array<i32>} : memref<8x128xf32, #tpu.memory_space<vmem>>, vector<8x128xf32>,
    return
  }
  func.func @transform_0(%arg0: i32, %arg1: i32) -> (i32, i32) {
    %c0_i32 = arith.constant 0 : i32
    return %arg0, %arg1 : i32, i32
  }
  func.func @transform_1(%arg0: i32, %arg1: i32) -> (i32, i32) {
    %c0_i32 = arith.constant 0 : i32
    %c0_i32_0 = arith.constant 0 : i32
    return %c0_i32, %arg1 : i32, i32
  }
  func.func @transform_2(%arg0: i32, %arg1: i32) -> (i32, i32) {
    %c0_i32 = arith.constant 0 : i32
    return %arg0, %arg1 : i32, i32
  }
}

</mosaic_0001>

<llo_original>
// kernel: tpu_custom_call.1
$region0: #{tpu_custom_call.1}
  #allocation0 [shape = 'u32[]', space=smem, size = 0x4, offset = 0x4, fixed_abs, tag = 'smem constant byte address 0x4 - core index']
  #allocation1 [shape = 'u32[144,128]{1,0:T(1,128)}', space=vmem, size = 0x12000, scoped, tag = 'internal scratch']
  %s0 = inlined_call_operand.hbm [shape: f32[8,128], index: 0, kind: input, shape index: {}]
  %s1 = inlined_call_operand.vmem [shape: f32[1,128], index: 1, kind: input, shape index: {}]
  %s2 = inlined_call_operand.hbm [shape: f32[8,128], index: 2, kind: output, shape index: {}]
  %s3 = sld [smem:[#allocation0]]
  $region22: #{tpu_custom_call.1} parent=0
    _
  %s5 = ssub.s32 1, %s3
  %s6 = scalar_select 0, %s5, %s3
  $region1: #{tpu_custom_call.1} parent=0
    #allocation2 [shape = 'u8[4096]{0}', space=vmem, size = 0x1000, scoped, tag = 'input window, operand 0, single buffered']
    #allocation3 [shape = 's32[1]{0}', space=sflag, size = 0x4, scoped, tag = 'scoped memory for tpu_custom_call.1']
    #allocation4 [shape = 's32[1]{0}', space=sflag, size = 0x4, scoped, tag = 'scoped memory for tpu_custom_call.1']
    #allocation5 [shape = 'u8[4096]{0}', space=vmem, size = 0x1000, scoped, tag = 'output window, operand 0, single buffered']
    %7 = vsyncpa [#allocation3], 0
    %8 = vsyncpa [#allocation4], 0
    // Predicated region
    $region2: #{tpu_custom_call.1} parent=1 // pred_check
      _
    $region3: #{tpu_custom_call.1} parent=1 // pred_check_branch
      %10 = sbr.rel (0) target = $region5
    $region4: #{tpu_custom_call.1} parent=1 // pred_region
      %s12 = ssub.s32 128, 128
      %13 = vsyncadd [#allocation3], %s12
      %s15 = sshll.u32 [#allocation2], 4
      %s16 = int_to_ptr.vmem [resolvable:$true] %s15
      %18 = dma.hbm_to_vmem [thread:$0]  %s0, 128, %s16, [#allocation3]
    $region5: #{tpu_custom_call.1} parent=1 // pred_fallthru
      _
    // Predicated region
    $region6: #{tpu_custom_call.1} parent=1 // pred_check
      _
    $region7: #{tpu_custom_call.1} parent=1 // pred_check_branch
      %20 = sbr.rel (0) target = $region9
    $region8: #{tpu_custom_call.1} parent=1 // pred_region
      _
    $region9: #{tpu_custom_call.1} parent=1 // pred_fallthru
      _
    // Predicated region
    $region10: #{tpu_custom_call.1} parent=1 // pred_check
      _
    $region11: #{tpu_custom_call.1} parent=1 // pred_check_branch
      %22 = sbr.rel (0) target = $region13
    $region12: #{tpu_custom_call.1} parent=1 // pred_region
      %23 = dma.done [#allocation3], 128
    $region13: #{tpu_custom_call.1} parent=1 // pred_fallthru
      _
    %v24 = vld [vmem:[#allocation2] sm:$0xff]
    %v25 = vld [vmem:[%s1] sm:$0x1]
    %v27 = vlaneseq
    %v28 = vshrl.u32 %v27, 7
    %v29 = vsub.s32 0, %v28
    %v30 = vrot.slane %v25, %v29
    %v32 = vadd.f32 %v24, %v30
    %33 = vst [vmem:[#allocation5] sm:$0xff] %v32
    // Predicated region
    $region14: #{tpu_custom_call.1} parent=1 // pred_check
      _
    $region15: #{tpu_custom_call.1} parent=1 // pred_check_branch
      %35 = sbr.rel (0) target = $region17
    $region16: #{tpu_custom_call.1} parent=1 // pred_region
      %s37 = ssub.s32 128, 128
      %38 = vsyncadd [#allocation4], %s37
      %s40 = sshll.u32 [#allocation5], 4
      %s41 = int_to_ptr.vmem [resolvable:$true] %s40
      %43 = dma.vmem_to_hbm [thread:$0]  %s41, 128, %s2, [#allocation4]
    $region17: #{tpu_custom_call.1} parent=1 // pred_fallthru
      _
    // Predicated region
    $region18: #{tpu_custom_call.1} parent=1 // pred_check
      _
    $region19: #{tpu_custom_call.1} parent=1 // pred_check_branch
      %45 = sbr.rel (0) target = $region21
    $region20: #{tpu_custom_call.1} parent=1 // pred_region
      %46 = dma.done [#allocation4], 128
    $region21: #{tpu_custom_call.1} parent=1 // pred_fallthru
      _
    %47 = vsyncpa [#allocation3], 1
    %48 = vsyncpa [#allocation4], 1

</llo_original>
